<compile_context>
chip_gen: v5e
topology: v5e:2x2
jax: 0.10.0
libtpu: 0.0.40
codegen_flags: <defaults>
</compile_context>

<pallas_src>
import functools

import jax
import jax.numpy as jnp
from jax.experimental import pallas as pl
from jax.experimental.pallas import tpu as pltpu


def _round_up(x: int, m: int) -> int:
    return (x + m - 1) // m * m


def _fused_mlp_kernel(x_ref, b_ref, *rest, out_pdims):
    """One batch-tile of the full MLP.

    rest = (w0, w1, ..., w_{L-1}, o_ref).  w_i is bf16 (in_pd_i, out_pd_i),
    b_ref is f32 (n_layers, max_out_pd) (stacked, padded biases).
    """
    o_ref = rest[-1]
    w_refs = rest[:-1]
    n_layers = len(w_refs)

    biases = b_ref[...]                     # (n_layers, max_out_pd) f32
    h = x_ref[...]                          # (tile_b, n_in) f32

    for i, w_ref in enumerate(w_refs):
        pd = out_pdims[i]
        w = w_ref[...]                      # bf16 (in_pd, pd)
        # bf16 operands on the MXU, f32 accumulate / epilogue.
        y = jnp.dot(h.astype(jnp.bfloat16), w,
                    preferred_element_type=jnp.float32)
        y = y + biases[i, :pd][None, :]     # f32 bias add
        if i < n_layers - 1:
            y = jnp.maximum(y, 0.0)         # ReLU on all layers except the last
        h = y

    o_ref[...] = h.astype(o_ref.dtype)


def prepare_mlp_params(params):
    """Pre-pad params ONCE (hoisted out of the per-call hot path).

    params: list of (w (in, out) f32, b (1, out) or (out,) f32) in layer order.
    Returns (weights, biases, out_dims):
      weights : tuple of bf16 arrays; layer 0 keeps the true input dim as K
                (x is not lane-padded), later layers use the previous padded
                output dim; output dims padded to multiples of 128.
      biases  : f32 (n_layers, max_out_pd) stacked, zero-padded.
      out_dims: python tuple of true (unpadded) output dims per layer.
    """
    n_layers = len(params)
    out_dims = tuple(w.shape[1] for w, _ in params)
    out_pdims = [_round_up(d, 128) for d in out_dims]

    weights = []
    for i, (w, _) in enumerate(params):
        in_d = w.shape[0]
        in_pd = in_d if i == 0 else out_pdims[i - 1]
        wp = jnp.zeros((in_pd, out_pdims[i]), jnp.bfloat16)
        wp = wp.at[:in_d, :out_dims[i]].set(w.astype(jnp.bfloat16))
        weights.append(wp)

    max_pd = max(out_pdims)
    biases = jnp.zeros((n_layers, max_pd), jnp.float32)
    for i, (_, b) in enumerate(params):
        biases = biases.at[i, :out_dims[i]].set(jnp.reshape(b, (-1,)))

    return tuple(weights), biases, out_dims


@functools.partial(jax.jit, static_argnames=("out_dims", "max_tile_b"))
def _mlp_forward_jit(x, weights, biases, out_dims, max_tile_b=512):
    B, n_in = x.shape
    n_layers = len(weights)
    out_pdims = tuple(int(w.shape[1]) for w in weights)   # padded out dims
    n_out = out_dims[-1]

    # Batch tiling: sublane-aligned, and >= 2 grid steps whenever B > 8 so both
    # v7x TensorCores get work (the batch axis is the only "parallel" dim).
    b8 = _round_up(max(B, 1), 8)
    if b8 >= 16:
        half = _round_up(-(-b8 // 2), 8)
        tile_b = min(max_tile_b, half)
    else:
        tile_b = b8
    b_pad = _round_up(b8, tile_b)

    # Only the batch dim of x is padded; the feature dim stays unpadded (reads
    # don't pay the masked-store penalty; Mosaic pads K in vregs).
    if b_pad != B:
        x = jnp.pad(x, ((0, b_pad - B), (0, 0)))

    kernel = functools.partial(_fused_mlp_kernel, out_pdims=out_pdims)

    # x / out tiles move with the batch grid index; weights & the stacked bias
    # array are pinned (index_map always (0, 0)) so they stay VMEM-resident.
    in_specs = [
        pl.BlockSpec((tile_b, n_in), lambda bi: (bi, 0)),            # x
        pl.BlockSpec(tuple(biases.shape), lambda bi: (0, 0)),        # biases
    ]
    for w in weights:
        in_specs.append(pl.BlockSpec(tuple(w.shape), lambda bi: (0, 0)))

    out_p = pl.pallas_call(
        kernel,
        out_shape=jax.ShapeDtypeStruct((b_pad, out_pdims[-1]), jnp.float32),
        grid=(b_pad // tile_b,),
        in_specs=in_specs,
        out_specs=pl.BlockSpec((tile_b, out_pdims[-1]), lambda bi: (bi, 0)),
        compiler_params=pltpu.CompilerParams(
            dimension_semantics=("parallel",),
            vmem_limit_bytes=32 * 1024 * 1024,
        ),
    )(x, biases, *weights)

    return out_p[:B, :n_out]


def mlp_forward(x, prepared, max_tile_b=512):
    """Fused MLP forward.  x: (B, n_inputs); prepared = prepare_mlp_params(params)."""
    weights, biases, out_dims = prepared
    return _mlp_forward_jit(x, weights, biases, out_dims=out_dims,
                            max_tile_b=max_tile_b)


def init_mlp_params(key, n_inputs, n_outputs, hidden_conf):
    """Deterministic init matching nn.Linear shapes.

    PyTorch stores weight as (out, in); we keep the transposed (in, out) form,
    which is what the kernel consumes (y = x @ W + b is identical math).
    """
    dims = [n_inputs] + list(hidden_conf) + [n_outputs]
    params = []
    for i in range(len(dims) - 1):
        fan_in, fan_out = dims[i], dims[i + 1]
        key, wk, bk = jax.random.split(key, 3)
        bound = 1.0 / jnp.sqrt(jnp.float32(fan_in))
        w = jax.random.uniform(wk, (fan_in, fan_out), jnp.float32, -bound, bound)
        b = jax.random.uniform(bk, (1, fan_out), jnp.float32, -bound, bound)
        params.append((w, b))
    return params


def mlp_reference(x, params):
    """Pure-JAX f32 reference (ReLU after every layer except the last)."""
    n_layers = len(params)
    for i, (w, b) in enumerate(params):
        x = x @ w + b
        if i < n_layers - 1:
            x = jnp.maximum(x, 0.0)
    return x


if __name__ == "__main__":
    key = jax.random.PRNGKey(0)

    # Mlp(n_inputs=32, n_outputs=16, hidden_conf=[64, 48])
    batch = 8
    n_inputs, n_outputs = 32, 16
    hidden_conf = [64, 48]

    key, xk = jax.random.split(key)
    x = jax.random.normal(xk, (batch, n_inputs), jnp.float32)
    params = init_mlp_params(key, n_inputs, n_outputs, hidden_conf)
    prepared = prepare_mlp_params(params)   # padded once, reused across calls

    out = jax.block_until_ready(mlp_forward(x, prepared))
    ref = mlp_reference(x, params)
    assert out.shape == (batch, n_outputs)
    # bf16 matmul operands vs f32 reference -> loosened tolerance.
    assert jnp.allclose(out, ref, atol=5e-2, rtol=5e-2), float(jnp.max(jnp.abs(out - ref)))

    # Second check: batch that needs padding + a 2-step "parallel" grid.
    key, xk2 = jax.random.split(key)
    x2 = jax.random.normal(xk2, (200, n_inputs), jnp.float32)
    out2 = jax.block_until_ready(mlp_forward(x2, prepared))
    ref2 = mlp_reference(x2, params)
    assert out2.shape == (200, n_outputs)
    assert jnp.allclose(out2, ref2, atol=5e-2, rtol=5e-2), float(jnp.max(jnp.abs(out2 - ref2)))

    print("KERNEL_OK")
</pallas_src>

<mosaic_0001>
module attributes {stable_mosaic.version = 11 : i64} {
  func.func @_fused_mlp_kernel(%arg0: i32, %arg1: memref<8x32xf32, #tpu.memory_space<vmem>>, %arg2: memref<3x128xf32, #tpu.memory_space<vmem>>, %arg3: memref<32x128xbf16, #tpu.memory_space<vmem>>, %arg4: memref<128x128xbf16, #tpu.memory_space<vmem>>, %arg5: memref<128x128xbf16, #tpu.memory_space<vmem>>, %arg6: memref<8x128xf32, #tpu.memory_space<vmem>>) attributes {dimension_semantics = [#tpu.dimension_semantics<parallel>], iteration_bounds = array<i64: 1>, scalar_prefetch = 0 : i64, scratch_operands = 0 : i64, tpu.core_type = #tpu.core_type<tc>, window_params = [{transform_indices = @transform_0, window_bounds = array<i64: 8, 32>}, {pipeline_mode = #tpu.pipeline_mode<synchronous>, transform_indices = @transform_1, window_bounds = array<i64: 3, 128>}, {pipeline_mode = #tpu.pipeline_mode<synchronous>, transform_indices = @transform_2, window_bounds = array<i64: 32, 128>}, {pipeline_mode = #tpu.pipeline_mode<synchronous>, transform_indices = @transform_3, window_bounds = array<i64: 128, 128>}, {pipeline_mode = #tpu.pipeline_mode<synchronous>, transform_indices = @transform_4, window_bounds = array<i64: 128, 128>}, {transform_indices = @transform_5, window_bounds = array<i64: 8, 128>}]} {
    %c0 = arith.constant 0 : index
    %c0_0 = arith.constant 0 : index
    %0 = vector.load %arg2[%c0, %c0_0] : memref<3x128xf32, #tpu.memory_space<vmem>>, vector<3x128xf32>
    %c0_1 = arith.constant 0 : index
    %c0_2 = arith.constant 0 : index
    %1 = vector.load %arg1[%c0_1, %c0_2] : memref<8x32xf32, #tpu.memory_space<vmem>>, vector<8x32xf32>
    %c0_3 = arith.constant 0 : index
    %c0_4 = arith.constant 0 : index
    %2 = vector.load %arg3[%c0_3, %c0_4] : memref<32x128xbf16, #tpu.memory_space<vmem>>, vector<32x128xbf16>
    %3 = arith.truncf %1 : vector<8x32xf32> to vector<8x32xbf16>
    %cst = arith.constant dense<0.000000e+00> : vector<8x128xf32>
    %4 = tpu.matmul %3, %2, %cst {dimension_numbers = #tpu.dot_dimension_numbers<[1], [0], [0], [1], [0, 0, 1, 1], [], []>} : vector<8x32xbf16>, vector<32x128xbf16>, vector<8x128xf32> -> vector<8x128xf32>
    %5 = vector.extract_strided_slice %0 {offsets = [0, 0], sizes = [1, 128], strides = [1, 1]} : vector<3x128xf32> to vector<1x128xf32>
    %6 = vector.shape_cast %5 : vector<1x128xf32> to vector<128xf32>
    %7 = vector.shape_cast %6 : vector<128xf32> to vector<1x128xf32>
    %8 = vector.broadcast %7 : vector<1x128xf32> to vector<8x128xf32>
    %9 = arith.addf %4, %8 : vector<8x128xf32>
    %cst_5 = arith.constant 0.000000e+00 : f32
    %10 = vector.broadcast %cst_5 : f32 to vector<8x128xf32>
    %11 = arith.maximumf %9, %10 : vector<8x128xf32>
    %c0_6 = arith.constant 0 : index
    %c0_7 = arith.constant 0 : index
    %12 = vector.load %arg4[%c0_6, %c0_7] : memref<128x128xbf16, #tpu.memory_space<vmem>>, vector<128x128xbf16>
    %13 = arith.truncf %11 : vector<8x128xf32> to vector<8x128xbf16>
    %cst_8 = arith.constant dense<0.000000e+00> : vector<8x128xf32>
    %14 = tpu.matmul %13, %12, %cst_8 {dimension_numbers = #tpu.dot_dimension_numbers<[1], [0], [0], [1], [0, 0, 1, 1], [], []>} : vector<8x128xbf16>, vector<128x128xbf16>, vector<8x128xf32> -> vector<8x128xf32>
    %15 = vector.extract_strided_slice %0 {offsets = [1, 0], sizes = [1, 128], strides = [1, 1]} : vector<3x128xf32> to vector<1x128xf32>
    %16 = vector.shape_cast %15 : vector<1x128xf32> to vector<128xf32>
    %17 = vector.shape_cast %16 : vector<128xf32> to vector<1x128xf32>
    %18 = vector.broadcast %17 : vector<1x128xf32> to vector<8x128xf32>
    %19 = arith.addf %14, %18 : vector<8x128xf32>
    %cst_9 = arith.constant 0.000000e+00 : f32
    %20 = vector.broadcast %cst_9 : f32 to vector<8x128xf32>
    %21 = arith.maximumf %19, %20 : vector<8x128xf32>
    %c0_10 = arith.constant 0 : index
    %c0_11 = arith.constant 0 : index
    %22 = vector.load %arg5[%c0_10, %c0_11] : memref<128x128xbf16, #tpu.memory_space<vmem>>, vector<128x128xbf16>
    %23 = arith.truncf %21 : vector<8x128xf32> to vector<8x128xbf16>
    %cst_12 = arith.constant dense<0.000000e+00> : vector<8x128xf32>
    %24 = tpu.matmul %23, %22, %cst_12 {dimension_numbers = #tpu.dot_dimension_numbers<[1], [0], [0], [1], [0, 0, 1, 1], [], []>} : vector<8x128xbf16>, vector<128x128xbf16>, vector<8x128xf32> -> vector<8x128xf32>
    %25 = vector.extract_strided_slice %0 {offsets = [2, 0], sizes = [1, 128], strides = [1, 1]} : vector<3x128xf32> to vector<1x128xf32>
    %26 = vector.shape_cast %25 : vector<1x128xf32> to vector<128xf32>
    %27 = vector.shape_cast %26 : vector<128xf32> to vector<1x128xf32>
    %28 = vector.broadcast %27 : vector<1x128xf32> to vector<8x128xf32>
    %29 = arith.addf %24, %28 : vector<8x128xf32>
    %c0_13 = arith.constant 0 : index
    %c0_14 = arith.constant 0 : index
    %30 = vector.load %arg6[%c0_13, %c0_14] : memref<8x128xf32, #tpu.memory_space<vmem>>, vector<8x128xf32>
    tpu.vector_store %arg6[%c0_13, %c0_14], %29 {strides = array<i32>} : memref<8x128xf32, #tpu.memory_space<vmem>>, vector<8x128xf32>,
    return
  }
  func.func @transform_0(%arg0: i32) -> (i32, i32) {
    %c0_i32 = arith.constant 0 : i32
    %c0_i32_0 = arith.constant 0 : i32
    return %arg0, %c0_i32 : i32, i32
  }
  func.func @transform_1(%arg0: i32) -> (i32, i32) {
    %c0_i32 = arith.constant 0 : i32
    %c0_i32_0 = arith.constant 0 : i32
    %c0_i32_1 = arith.constant 0 : i32
    return %c0_i32, %c0_i32_0 : i32, i32
  }
  func.func @transform_2(%arg0: i32) -> (i32, i32) {
    %c0_i32 = arith.constant 0 : i32
    %c0_i32_0 = arith.constant 0 : i32
    %c0_i32_1 = arith.constant 0 : i32
    return %c0_i32, %c0_i32_0 : i32, i32
  }
  func.func @transform_3(%arg0: i32) -> (i32, i32) {
    %c0_i32 = arith.constant 0 : i32
    %c0_i32_0 = arith.constant 0 : i32
    %c0_i32_1 = arith.constant 0 : i32
    return %c0_i32, %c0_i32_0 : i32, i32
  }
  func.func @transform_4(%arg0: i32) -> (i32, i32) {
    %c0_i32 = arith.constant 0 : i32
    %c0_i32_0 = arith.constant 0 : i32
    %c0_i32_1 = arith.constant 0 : i32
    return %c0_i32, %c0_i32_0 : i32, i32
  }
  func.func @transform_5(%arg0: i32) -> (i32, i32) {
    %c0_i32 = arith.constant 0 : i32
    %c0_i32_0 = arith.constant 0 : i32
    return %arg0, %c0_i32 : i32, i32
  }
}

</mosaic_0001>

<llo_original>
// kernel: _mlp_forward_jit.1
$region0: #{_mlp_forward_jit.1}
  #allocation0 [shape = 'u32[]', space=smem, size = 0x4, offset = 0x4, fixed_abs, tag = 'smem constant byte address 0x4 - core index']
  #allocation1 [shape = 'u32[72,128]{1,0:T(1,128)}', space=vmem, size = 0x9000, scoped, tag = 'internal scratch']
  %s0 = inlined_call_operand.hbm [shape: f32[8,32], index: 0, kind: input, shape index: {}]
  %s1 = inlined_call_operand.hbm [shape: f32[3,128], index: 1, kind: input, shape index: {}]
  %s2 = inlined_call_operand.hbm [shape: bf16[32,128], index: 2, kind: input, shape index: {}]
  %s3 = inlined_call_operand.hbm [shape: bf16[128,128], index: 3, kind: input, shape index: {}]
  %s4 = inlined_call_operand.hbm [shape: bf16[128,128], index: 4, kind: input, shape index: {}]
  %s5 = inlined_call_operand.hbm [shape: f32[8,128], index: 5, kind: output, shape index: {}]
  %s6 = sld [smem:[#allocation0]]
  $region50: #{_mlp_forward_jit.1} parent=0
    _
  %s8 = ssub.s32 1, %s6
  %s9 = scalar_select 0, %s8, %s6
  $region1: #{_mlp_forward_jit.1} parent=0
    #allocation2 [shape = 'u8[4096]{0}', space=vmem, size = 0x1000, scoped, tag = 'input window, operand 0, single buffered']
    #allocation3 [shape = 's32[1]{0}', space=sflag, size = 0x4, scoped, tag = 'scoped memory for _mlp_forward_jit.1']
    #allocation4 [shape = 's32[1]{0}', space=sflag, size = 0x4, scoped, tag = 'scoped memory for _mlp_forward_jit.1']
    #allocation5 [shape = 'u8[2048]{0}', space=vmem, size = 0x800, scoped, tag = 'input window, operand 1, single buffered']
    #allocation6 [shape = 's32[1]{0}', space=sflag, size = 0x4, scoped, tag = 'scoped memory for _mlp_forward_jit.1']
    #allocation7 [shape = 'u8[8192]{0}', space=vmem, size = 0x2000, scoped, tag = 'input window, operand 2, single buffered']
    #allocation8 [shape = 'u8[32768]{0}', space=vmem, size = 0x8000, scoped, tag = 'input window, operand 3, single buffered']
    #allocation9 [shape = 's32[1]{0}', space=sflag, size = 0x4, scoped, tag = 'scoped memory for _mlp_forward_jit.1']
    #allocation10 [shape = 'u8[32768]{0}', space=vmem, size = 0x8000, scoped, tag = 'input window, operand 4, single buffered']
    #allocation11 [shape = 'u8[4096]{0}', space=vmem, size = 0x1000, scoped, tag = 'output window, operand 0, single buffered']
    %10 = vsyncpa [#allocation3], 0
    %11 = vsyncpa [#allocation6], 0
    %12 = vsyncpa [#allocation9], 0
    %13 = vsyncpa [#allocation4], 0
    // Predicated region
    $region2: #{_mlp_forward_jit.1} parent=1 // pred_check
      _
    $region3: #{_mlp_forward_jit.1} parent=1 // pred_check_branch
      %15 = sbr.rel (0) target = $region5
    $region4: #{_mlp_forward_jit.1} parent=1 // pred_region
      %17 = vsyncadd [#allocation3], 0
      %s19 = sshll.u32 %s0, 4
      %s20 = int_to_ptr.hbm [resolvable:$true] %s19
      %s21 = sshll.u32 [#allocation2], 4
      %s22 = int_to_ptr.vmem [resolvable:$true] %s21
      %24 = dma.hbm_to_vmem [thread:$0]  %s20, 128, %s22, [#allocation3]
    $region5: #{_mlp_forward_jit.1} parent=1 // pred_fallthru
      _
    // Predicated region
    $region6: #{_mlp_forward_jit.1} parent=1 // pred_check
      _
    $region7: #{_mlp_forward_jit.1} parent=1 // pred_check_branch
      %26 = sbr.rel (0) target = $region9
    $region8: #{_mlp_forward_jit.1} parent=1 // pred_region
      %28 = vsyncadd [#allocation6], 0
      %s30 = sshll.u32 %s1, 4
      %s31 = int_to_ptr.hbm [resolvable:$true] %s30
      %s32 = sshll.u32 [#allocation5], 4
      %s33 = int_to_ptr.vmem [resolvable:$true] %s32
      %35 = dma.hbm_to_vmem [thread:$0]  %s31, 64, %s33, [#allocation6]
    $region9: #{_mlp_forward_jit.1} parent=1 // pred_fallthru
      _
    // Predicated region
    $region10: #{_mlp_forward_jit.1} parent=1 // pred_check
      _
    $region11: #{_mlp_forward_jit.1} parent=1 // pred_check_branch
      %37 = sbr.rel (0) target = $region13
    $region12: #{_mlp_forward_jit.1} parent=1 // pred_region
      %39 = vsyncadd [#allocation6], 0
      %s40 = sshll.u32 %s2, 4
      %s41 = int_to_ptr.hbm [resolvable:$true] %s40
      %s42 = sshll.u32 [#allocation7], 4
      %s43 = int_to_ptr.vmem [resolvable:$true] %s42
      %48 = dma.hbm_to_vmem [thread:$0]  %s41, 256, %s43, [#allocation6], 64, 64, 4
    $region13: #{_mlp_forward_jit.1} parent=1 // pred_fallthru
      _
    // Predicated region
    $region14: #{_mlp_forward_jit.1} parent=1 // pred_check
      _
    $region15: #{_mlp_forward_jit.1} parent=1 // pred_check_branch
      %50 = sbr.rel (0) target = $region17
    $region16: #{_mlp_forward_jit.1} parent=1 // pred_region
      %52 = vsyncadd [#allocation9], 0
      %s53 = sshll.u32 %s3, 4
      %s54 = int_to_ptr.hbm [resolvable:$true] %s53
      %s55 = sshll.u32 [#allocation8], 4
      %s56 = int_to_ptr.vmem [resolvable:$true] %s55
      %61 = dma.hbm_to_vmem [thread:$0]  %s54, 1024, %s56, [#allocation9], 64, 64, 4
    $region17: #{_mlp_forward_jit.1} parent=1 // pred_fallthru
      _
    // Predicated region
    $region18: #{_mlp_forward_jit.1} parent=1 // pred_check
      _
    $region19: #{_mlp_forward_jit.1} parent=1 // pred_check_branch
      %63 = sbr.rel (0) target = $region21
    $region20: #{_mlp_forward_jit.1} parent=1 // pred_region
      %65 = vsyncadd [#allocation9], 0
      %s66 = sshll.u32 %s4, 4
      %s67 = int_to_ptr.hbm [resolvable:$true] %s66
      %s68 = sshll.u32 [#allocation10], 4
      %s69 = int_to_ptr.vmem [resolvable:$true] %s68
      %74 = dma.hbm_to_vmem [thread:$0]  %s67, 1024, %s69, [#allocation9], 64, 64, 4
    $region21: #{_mlp_forward_jit.1} parent=1 // pred_fallthru
      _
    // Predicated region
    $region22: #{_mlp_forward_jit.1} parent=1 // pred_check
      _
    $region23: #{_mlp_forward_jit.1} parent=1 // pred_check_branch
      %76 = sbr.rel (0) target = $region25
    $region24: #{_mlp_forward_jit.1} parent=1 // pred_region
      %78 = dma.done [#allocation3], 128
    $region25: #{_mlp_forward_jit.1} parent=1 // pred_fallthru
      _
    // Predicated region
    $region26: #{_mlp_forward_jit.1} parent=1 // pred_check
      _
    $region27: #{_mlp_forward_jit.1} parent=1 // pred_check_branch
      %80 = sbr.rel (0) target = $region29
    $region28: #{_mlp_forward_jit.1} parent=1 // pred_region
      %82 = dma.done [#allocation6], 64
    $region29: #{_mlp_forward_jit.1} parent=1 // pred_fallthru
      _
    // Predicated region
    $region30: #{_mlp_forward_jit.1} parent=1 // pred_check
      _
    $region31: #{_mlp_forward_jit.1} parent=1 // pred_check_branch
      %84 = sbr.rel (0) target = $region33
    $region32: #{_mlp_forward_jit.1} parent=1 // pred_region
      %86 = dma.done [#allocation6], 256
    $region33: #{_mlp_forward_jit.1} parent=1 // pred_fallthru
      _
    // Predicated region
    $region34: #{_mlp_forward_jit.1} parent=1 // pred_check
      _
    $region35: #{_mlp_forward_jit.1} parent=1 // pred_check_branch
      %88 = sbr.rel (0) target = $region37
    $region36: #{_mlp_forward_jit.1} parent=1 // pred_region
      %90 = dma.done [#allocation9], 1024
    $region37: #{_mlp_forward_jit.1} parent=1 // pred_fallthru
      _
    // Predicated region
    $region38: #{_mlp_forward_jit.1} parent=1 // pred_check
      _
    $region39: #{_mlp_forward_jit.1} parent=1 // pred_check_branch
      %92 = sbr.rel (0) target = $region41
    $region40: #{_mlp_forward_jit.1} parent=1 // pred_region
      %94 = dma.done [#allocation9], 1024
    $region41: #{_mlp_forward_jit.1} parent=1 // pred_fallthru
      _
    %v96 = vld [vmem:[#allocation5] sm:$0x7]
    %v97 = vld [vmem:[#allocation2] sm:$0xff]
    %v98 = vld [vmem:[#allocation7] sm:$0xf]
    %v99 = vld [vmem:[#allocation7 + $0x4] sm:$0xf]
    %v100 = vld [vmem:[#allocation7 + $0x8] sm:$0xf]
    %v101 = vld [vmem:[#allocation7 + $0xc] sm:$0xf]
    %v102 = vpack.c.bf16 %v97, %v97
    %v103 = vperm.slane %v96, 0
    %v108 = vunpack.c.l.b16 %v98
    %v109 = vunpack.c.l.b16 %v99
    %v110 = vunpack.c.l.b16 %v100
    %v111 = vunpack.c.l.b16 %v101
    %v112 = vpack.c.b16 %v109, %v108
    %v113 = vpack.c.b16 %v111, %v110
    %vm116 = vcmask 261120
    %v118 = vsel %vm116, %v102, 0
    %120 = vmatpush.bf16.msra.mxu0 0
    %121 = vmatpush.bf16.msra.mxu0 0
    %122 = vmatpush.bf16.msra.mxu0 0
    %123 = vmatpush.bf16.msra.mxu0 0
    %124 = vmatpush.bf16.msra.mxu0 0
    %125 = vmatpush.bf16.msra.mxu0 0
    %126 = vmatpush.bf16.msra.mxu0 %v113
    %127 = vmatpush.bf16.msra.mxu0 %v112
    %128 = vmatmul.bf16.gmra.mxu0 %v118
    %v129 = vpop.f32.mrf.mxu0
    %v130 = vadd.f32 %v103, %v129
    %v131 = vpop.f32.mrf.mxu0
    %132 = vdwg.mxu0
    %v133 = vmax.f32 %v130, 0.0
    %v134 = vld [vmem:[#allocation8] sm:$0xf]
    %v135 = vld [vmem:[#allocation8 + $0x4] sm:$0xf]
    %v136 = vld [vmem:[#allocation8 + $0x8] sm:$0xf]
    %v137 = vld [vmem:[#allocation8 + $0xc] sm:$0xf]
    %v138 = vld [vmem:[#allocation8 + $0x10] sm:$0xf]
    %v139 = vld [vmem:[#allocation8 + $0x14] sm:$0xf]
    %v140 = vld [vmem:[#allocation8 + $0x18] sm:$0xf]
    %v141 = vld [vmem:[#allocation8 + $0x1c] sm:$0xf]
    %v142 = vld [vmem:[#allocation8 + $0x20] sm:$0xf]
    %v143 = vld [vmem:[#allocation8 + $0x24] sm:$0xf]
    %v144 = vld [vmem:[#allocation8 + $0x28] sm:$0xf]
    %v145 = vld [vmem:[#allocation8 + $0x2c] sm:$0xf]
    %v146 = vld [vmem:[#allocation8 + $0x30] sm:$0xf]
    %v147 = vld [vmem:[#allocation8 + $0x34] sm:$0xf]
    %v148 = vld [vmem:[#allocation8 + $0x38] sm:$0xf]
    %v149 = vld [vmem:[#allocation8 + $0x3c] sm:$0xf]
    %v150 = vpack.c.bf16 %v133, %v133
    %v151 = vperm.slane %v96, 1
    %v168 = vunpack.c.l.b16 %v134
    %v169 = vunpack.c.l.b16 %v135
    %v170 = vunpack.c.l.b16 %v136
    %v171 = vunpack.c.l.b16 %v137
    %v172 = vunpack.c.l.b16 %v138
    %v173 = vunpack.c.l.b16 %v139
    %v174 = vunpack.c.l.b16 %v140
    %v175 = vunpack.c.l.b16 %v141
    %v176 = vunpack.c.l.b16 %v142
    %v177 = vunpack.c.l.b16 %v143
    %v178 = vunpack.c.l.b16 %v144
    %v179 = vunpack.c.l.b16 %v145
    %v180 = vunpack.c.l.b16 %v146
    %v181 = vunpack.c.l.b16 %v147
    %v182 = vunpack.c.l.b16 %v148
    %v183 = vunpack.c.l.b16 %v149
    %v184 = vpack.c.b16 %v169, %v168
    %v185 = vpack.c.b16 %v171, %v170
    %v186 = vpack.c.b16 %v173, %v172
    %v187 = vpack.c.b16 %v175, %v174
    %v188 = vpack.c.b16 %v177, %v176
    %v189 = vpack.c.b16 %v179, %v178
    %v190 = vpack.c.b16 %v181, %v180
    %v191 = vpack.c.b16 %v183, %v182
    %200 = vmatpush.bf16.msra.mxu0 %v191
    %201 = vmatpush.bf16.msra.mxu0 %v190
    %202 = vmatpush.bf16.msra.mxu0 %v189
    %203 = vmatpush.bf16.msra.mxu0 %v188
    %204 = vmatpush.bf16.msra.mxu0 %v187
    %205 = vmatpush.bf16.msra.mxu0 %v186
    %206 = vmatpush.bf16.msra.mxu0 %v185
    %207 = vmatpush.bf16.msra.mxu0 %v184
    %208 = vmatmul.bf16.gmra.mxu0 %v150
    %v209 = vpop.f32.mrf.mxu0
    %v210 = vadd.f32 %v151, %v209
    %v211 = vpop.f32.mrf.mxu0
    %212 = vdwg.mxu0
    %v213 = vmax.f32 %v210, 0.0
    %v214 = vld [vmem:[#allocation10] sm:$0xf]
    %v215 = vld [vmem:[#allocation10 + $0x4] sm:$0xf]
    %v216 = vld [vmem:[#allocation10 + $0x8] sm:$0xf]
    %v217 = vld [vmem:[#allocation10 + $0xc] sm:$0xf]
    %v218 = vld [vmem:[#allocation10 + $0x10] sm:$0xf]
    %v219 = vld [vmem:[#allocation10 + $0x14] sm:$0xf]
    %v220 = vld [vmem:[#allocation10 + $0x18] sm:$0xf]
    %v221 = vld [vmem:[#allocation10 + $0x1c] sm:$0xf]
    %v222 = vld [vmem:[#allocation10 + $0x20] sm:$0xf]
    %v223 = vld [vmem:[#allocation10 + $0x24] sm:$0xf]
    %v224 = vld [vmem:[#allocation10 + $0x28] sm:$0xf]
    %v225 = vld [vmem:[#allocation10 + $0x2c] sm:$0xf]
    %v226 = vld [vmem:[#allocation10 + $0x30] sm:$0xf]
    %v227 = vld [vmem:[#allocation10 + $0x34] sm:$0xf]
    %v228 = vld [vmem:[#allocation10 + $0x38] sm:$0xf]
    %v229 = vld [vmem:[#allocation10 + $0x3c] sm:$0xf]
    %v230 = vpack.c.bf16 %v213, %v213
    %v231 = vperm.slane %v96, 2
    %v248 = vunpack.c.l.b16 %v214
    %v249 = vunpack.c.l.b16 %v215
    %v250 = vunpack.c.l.b16 %v216
    %v251 = vunpack.c.l.b16 %v217
    %v252 = vunpack.c.l.b16 %v218
    %v253 = vunpack.c.l.b16 %v219
    %v254 = vunpack.c.l.b16 %v220
    %v255 = vunpack.c.l.b16 %v221
    %v256 = vunpack.c.l.b16 %v222
    %v257 = vunpack.c.l.b16 %v223
    %v258 = vunpack.c.l.b16 %v224
    %v259 = vunpack.c.l.b16 %v225
    %v260 = vunpack.c.l.b16 %v226
    %v261 = vunpack.c.l.b16 %v227
    %v262 = vunpack.c.l.b16 %v228
    %v263 = vunpack.c.l.b16 %v229
    %v264 = vpack.c.b16 %v249, %v248
    %v265 = vpack.c.b16 %v251, %v250
    %v266 = vpack.c.b16 %v253, %v252
    %v267 = vpack.c.b16 %v255, %v254
    %v268 = vpack.c.b16 %v257, %v256
    %v269 = vpack.c.b16 %v259, %v258
    %v270 = vpack.c.b16 %v261, %v260
    %v271 = vpack.c.b16 %v263, %v262
    %280 = vmatpush.bf16.msra.mxu0 %v271
    %281 = vmatpush.bf16.msra.mxu0 %v270
    %282 = vmatpush.bf16.msra.mxu0 %v269
    %283 = vmatpush.bf16.msra.mxu0 %v268
    %284 = vmatpush.bf16.msra.mxu0 %v267
    %285 = vmatpush.bf16.msra.mxu0 %v266
    %286 = vmatpush.bf16.msra.mxu0 %v265
    %287 = vmatpush.bf16.msra.mxu0 %v264
    %288 = vmatmul.bf16.gmra.mxu0 %v230
    %v289 = vpop.f32.mrf.mxu0
    %v290 = vadd.f32 %v231, %v289
    %v291 = vpop.f32.mrf.mxu0
    %292 = vdwg.mxu0
    %293 = vst [vmem:[#allocation11] sm:$0xff] %v290
    // Predicated region
    $region42: #{_mlp_forward_jit.1} parent=1 // pred_check
      _
    $region43: #{_mlp_forward_jit.1} parent=1 // pred_check_branch
      %295 = sbr.rel (0) target = $region45
    $region44: #{_mlp_forward_jit.1} parent=1 // pred_region
      %297 = vsyncadd [#allocation4], 0
      %s299 = sshll.u32 [#allocation11], 4
      %s300 = int_to_ptr.vmem [resolvable:$true] %s299
      %s301 = sshll.u32 %s5, 4
      %s302 = int_to_ptr.hbm [resolvable:$true] %s301
      %304 = dma.vmem_to_hbm [thread:$0]  %s300, 128, %s302, [#allocation4]
    $region45: #{_mlp_forward_jit.1} parent=1 // pred_fallthru
      _
    // Predicated region
    $region46: #{_mlp_forward_jit.1} parent=1 // pred_check
      _
    $region47: #{_mlp_forward_jit.1} parent=1 // pred_check_branch
      %306 = sbr.rel (0) target = $region49
    $region48: #{_mlp_forward_jit.1} parent=1 // pred_region
      %308 = dma.done [#allocation4], 128
    $region49: #{_mlp_forward_jit.1} parent=1 // pred_fallthru
      _
    %309 = vsyncpa [#allocation3], 1
    %310 = vsyncpa [#allocation6], 1
    %311 = vsyncpa [#allocation9], 1
    %312 = vsyncpa [#allocation4], 1

</llo_original>
